<compile_context>
chip_gen: v7x
topology: tpu7x:2x2x1
jax: 0.10.0
libtpu: 0.0.40
codegen_flags: <defaults>
</compile_context>

<pallas_src>
import math
from functools import partial

import jax
import jax.numpy as jnp
from jax.experimental import pallas as pl
from jax.experimental.pallas import tpu as pltpu


# ----------------------------- helpers -------------------------------------

def _round_up(x, m):
    return (x + m - 1) // m * m


def _pick_tn(n, preferred=512):
    """Largest multiple of 128 <= preferred that divides n (n must be 128-aligned)."""
    assert n % 128 == 0
    tn = min(preferred, n)
    while n % tn:
        tn -= 128
    return tn


def _mm_compiler_params(M, K, tn, w_itemsize):
    # double-buffered x + w + out blocks, plus margin; capped for v7x's 64 MiB VMEM.
    need = 2 * (M * K * 4 + K * tn * w_itemsize + M * tn * 4) + (4 << 20)
    limit = int(min(max(need, 16 << 20), 48 << 20))
    return pltpu.CompilerParams(dimension_semantics=("parallel",),
                                vmem_limit_bytes=limit)


# ----------------------------- matmul kernels -------------------------------

def _matmul_kernel(x_ref, w_ref, o_ref):
    o_ref[...] = jnp.dot(x_ref[...].astype(w_ref.dtype), w_ref[...],
                         preferred_element_type=jnp.float32)


def _rms_matmul_kernel(x_ref, g_ref, w_ref, o_ref, *, eps):
    # RMSNorm fused into the matmul: normalize the resident x block, then MXU matmul.
    x = x_ref[...]
    var = jnp.mean(x * x, axis=-1, keepdims=True)
    xn = (x * jax.lax.rsqrt(var + eps)) * g_ref[...]
    o_ref[...] = jnp.dot(xn.astype(w_ref.dtype), w_ref[...],
                         preferred_element_type=jnp.float32)


def _swiglu_matmul_kernel(g_ref, u_ref, w_ref, o_ref):
    # SwiGLU fused into the down-projection matmul.
    g = g_ref[...]
    x = (g * jax.nn.sigmoid(g)) * u_ref[...]
    o_ref[...] = jnp.dot(x.astype(w_ref.dtype), w_ref[...],
                         preferred_element_type=jnp.float32)


def _tiled_matmul_call(kernel, resident_inputs, w, M, preferred_tn=512):
    """Shared N-tiled pallas_call: resident activation blocks, weight tiled along N."""
    K, N = w.shape
    Np = _round_up(N, 128)
    if Np != N:
        w = jnp.pad(w, ((0, 0), (0, Np - N)))      # keep lane-dense, 128-aligned tiles
    tn = _pick_tn(Np, preferred_tn)
    grid = (Np // tn,)

    in_specs = [pl.BlockSpec(r.shape, lambda j, nd=r.ndim: (0,) * nd)
                for r in resident_inputs]
    in_specs.append(pl.BlockSpec((K, tn), lambda j: (0, j)))
    out_specs = pl.BlockSpec((M, tn), lambda j: (0, j))

    out = pl.pallas_call(
        kernel,
        out_shape=jax.ShapeDtypeStruct((M, Np), jnp.float32),
        grid_spec=pl.GridSpec(grid=grid, in_specs=in_specs, out_specs=out_specs),
        compiler_params=_mm_compiler_params(M, K, tn, jnp.dtype(w.dtype).itemsize),
    )(*resident_inputs, w)
    return out[:, :N] if Np != N else out


def matmul(x, w, preferred_tn=512):
    return _tiled_matmul_call(_matmul_kernel, [x], w, x.shape[0], preferred_tn)


def rms_matmul(x, gain, w, eps=1e-6, preferred_tn=512):
    return _tiled_matmul_call(partial(_rms_matmul_kernel, eps=eps),
                              [x, gain], w, x.shape[0], preferred_tn)


def swiglu_matmul(g, u, w, preferred_tn=512):
    return _tiled_matmul_call(_swiglu_matmul_kernel, [g, u], w, g.shape[0],
                              preferred_tn)


# ------------------------- flash-decode attention ---------------------------

def _flash_decode_kernel(q_ref, k_ref, v_ref, bias_ref, o_ref,
                         m_sc, l_sc, acc_sc, *, scale):
    t = pl.program_id(1)

    @pl.when(t == 0)
    def _():
        m_sc[...] = jnp.full_like(m_sc, -1e30)
        l_sc[...] = jnp.zeros_like(l_sc)
        acc_sc[...] = jnp.zeros_like(acc_sc)

    q = q_ref[0]                       # (G, D)   bf16
    k = k_ref[0]                       # (tk, D)  bf16
    v = v_ref[0]                       # (tk, D)  bf16
    b = bias_ref[0]                    # (1, tk)  f32 (broadcast over query heads)

    s = jax.lax.dot_general(q, k, (((1,), (1,)), ((), ())),
                            preferred_element_type=jnp.float32) * scale
    s = s + b                                              # (G, tk)
    m_new = jnp.maximum(m_sc[...], jnp.max(s, axis=-1, keepdims=True))
    alpha = jnp.exp(m_sc[...] - m_new)
    p = jnp.exp(s - m_new)
    l_sc[...] = alpha * l_sc[...] + jnp.sum(p, axis=-1, keepdims=True)
    acc_sc[...] = alpha * acc_sc[...] + jnp.dot(
        p.astype(v.dtype), v, preferred_element_type=jnp.float32)
    m_sc[...] = m_new

    @pl.when(t == pl.num_programs(1) - 1)
    def _():
        inv_l = pl.reciprocal(l_sc[...], approx=True)
        o_ref[0] = (acc_sc[...] * inv_l).astype(o_ref.dtype)


def flash_decode_attention(q, k, v, bias, kv_heads, *, scale):
    """
    q:    (B, G, D)   bf16  (B = bs * kv_heads, G = query heads per kv head)
    k, v: (B, T, D)   bf16
    bias: (bs, 1, T)  f32   additive mask, shared across kv heads (indexed in-kernel)
    """
    B, G, D = q.shape
    T = k.shape[1]
    tk = 128 if T >= 128 else _round_up(T, 8)
    Tp = _round_up(T, tk)
    if Tp != T:
        pad = Tp - T
        k = jnp.pad(k, ((0, 0), (0, pad), (0, 0)))
        v = jnp.pad(v, ((0, 0), (0, pad), (0, 0)))
        bias = jnp.pad(bias, ((0, 0), (0, 0), (0, pad)), constant_values=-1e9)

    grid = (B, Tp // tk)
    return pl.pallas_call(
        partial(_flash_decode_kernel, scale=scale),
        out_shape=jax.ShapeDtypeStruct((B, G, D), q.dtype),
        grid_spec=pltpu.PrefetchScalarGridSpec(
            num_scalar_prefetch=0,
            grid=grid,
            in_specs=[
                pl.BlockSpec((1, G, D), lambda b, t: (b, 0, 0)),
                pl.BlockSpec((1, tk, D), lambda b, t: (b, t, 0)),
                pl.BlockSpec((1, tk, D), lambda b, t: (b, t, 0)),
                pl.BlockSpec((1, 1, tk), lambda b, t: (b // kv_heads, 0, t)),
            ],
            out_specs=pl.BlockSpec((1, G, D), lambda b, t: (b, 0, 0)),
            scratch_shapes=[pltpu.VMEM((G, 1), jnp.float32),
                            pltpu.VMEM((G, 1), jnp.float32),
                            pltpu.VMEM((G, D), jnp.float32)]),
        compiler_params=pltpu.CompilerParams(
            dimension_semantics=("parallel", "arbitrary")),
    )(q, k, v, bias)


# ------------------------------ JAX glue ------------------------------------

def rotate_half(x):
    d = x.shape[-1]
    return jnp.concatenate([-x[..., d // 2:], x[..., :d // 2]], axis=-1)


def rope_cos_sin(pos, head_dim, theta=10000.0):
    inv_freq = 1.0 / (theta ** (jnp.arange(0, head_dim, 2, dtype=jnp.float32)
                                / head_dim))
    ang = pos.astype(jnp.float32) * inv_freq
    ang = jnp.concatenate([ang, ang], axis=-1)      # (head_dim,)
    return jnp.cos(ang), jnp.sin(ang)


def init_params(key, cfg):
    hidden, heads, kvh = cfg["hidden"], cfg["heads"], cfg["kv_heads"]
    D, inter, vocab, L = cfg["head_dim"], cfg["intermediate"], cfg["vocab"], cfg["layers"]
    keys = jax.random.split(key, 2 + 7 * L)
    std = 0.02

    def w(k, shape):  # bf16 weights: halves HBM bytes for the weight-streaming bound
        return (jax.random.normal(k, shape, jnp.float32) * std).astype(jnp.bfloat16)

    layers = []
    for li in range(L):
        kq, kk, kv_, ko, kg, ku, kd = keys[2 + 7 * li: 2 + 7 * (li + 1)]
        layers.append(dict(
            # fused QKV and gate|up weight streams (one matmul dispatch each)
            w_qkv=jnp.concatenate([w(kq, (hidden, heads * D)),
                                   w(kk, (hidden, kvh * D)),
                                   w(kv_, (hidden, kvh * D))], axis=1),
            wo=w(ko, (heads * D, hidden)),
            w_gate_up=jnp.concatenate([w(kg, (hidden, inter)),
                                       w(ku, (hidden, inter))], axis=1),
            wdown=w(kd, (inter, hidden)),
            input_norm=jnp.ones((1, hidden), jnp.float32),
            post_norm=jnp.ones((1, hidden), jnp.float32),
        ))
    return dict(
        cfg=cfg,
        embed=w(keys[0], (vocab, hidden)),
        lm_head=w(keys[1], (hidden, vocab)),
        final_norm=jnp.ones((1, hidden), jnp.float32),
        layers=layers,
    )


def mistral_decode(params, input_ids, attention_mask, position_ids, past_kv):
    cfg = params["cfg"]
    bs = input_ids.shape[0]
    H, KVH, D = cfg["heads"], cfg["kv_heads"], cfg["head_dim"]
    G = H // KVH
    inter = cfg["intermediate"]

    h = jnp.take(params["embed"], input_ids[:, 0], axis=0).astype(jnp.float32)
    cos, sin = rope_cos_sin(position_ids[0, 0], D)
    bias_b = ((1.0 - attention_mask.astype(jnp.float32)) * (-1e9))[:, None, :]  # (bs,1,T)

    presents = []
    for li, lp in enumerate(params["layers"]):
        # fused RMSNorm + QKV projection (single weight stream, single dispatch)
        qkv = rms_matmul(h, lp["input_norm"], lp["w_qkv"])
        q = qkv[:, :H * D].reshape(bs, H, D)
        k = qkv[:, H * D:(H + KVH) * D].reshape(bs, KVH, D)
        v = qkv[:, (H + KVH) * D:].reshape(bs, KVH, D)
        q = q * cos + rotate_half(q) * sin
        k = k * cos + rotate_half(k) * sin

        pk, pv = past_kv[li]
        # TODO(synk): the wrapper contract returns (T+1)-length presents, so a true
        # in-place preallocated max-seq KV cache (input_output_aliases) is not
        # expressible here; keep the append as plain-JAX concatenate.
        new_k = jnp.concatenate([pk, k[:, :, None, :].astype(pk.dtype)], axis=2)
        new_v = jnp.concatenate([pv, v[:, :, None, :].astype(pv.dtype)], axis=2)
        presents.append((new_k, new_v))
        T = new_k.shape[2]

        qf = q.reshape(bs * KVH, G, D).astype(jnp.bfloat16)
        kf = new_k.reshape(bs * KVH, T, D)
        vf = new_v.reshape(bs * KVH, T, D)
        attn = flash_decode_attention(qf, kf, vf, bias_b, KVH,
                                      scale=1.0 / math.sqrt(D))
        attn = attn.reshape(bs, H * D)
        h = h + matmul(attn, lp["wo"])

        # fused RMSNorm + gate|up projection, then SwiGLU fused into down-projection
        gu = rms_matmul(h, lp["post_norm"], lp["w_gate_up"])
        g, u = gu[:, :inter], gu[:, inter:]
        h = h + swiglu_matmul(g, u, lp["wdown"])

    logits = rms_matmul(h, params["final_norm"], params["lm_head"])
    return logits.reshape(bs, 1, cfg["vocab"]), tuple(presents)


def base_model_wrapper_forward(params, input_ids, attention_mask, position_ids, *kv):
    """Mirror of BaseModelWrapper.forward."""
    kv_pairs = tuple(zip(kv[:-1:2], kv[1::2]))
    logits, presents = mistral_decode(params, input_ids, attention_mask,
                                      position_ids, kv_pairs)
    outputs = [logits] + [el for subl in presents for el in subl]
    return tuple(outputs)


# ------------------------------- main ---------------------------------------

if __name__ == "__main__":
    cfg = dict(hidden=128, heads=4, kv_heads=2, head_dim=32,
               intermediate=256, vocab=256, layers=2)
    bs, past_len = 2, 7
    seqlen = past_len + 1

    key = jax.random.PRNGKey(0)
    kp, ki, kk = jax.random.split(key, 3)
    params = init_params(kp, cfg)

    input_ids = jax.random.randint(ki, (bs, 1), 0, cfg["vocab"], dtype=jnp.int32)
    attention_mask = jnp.ones((bs, seqlen), dtype=jnp.float32)
    position_ids = jnp.array([[past_len]], dtype=jnp.int32)

    kv_keys = jax.random.split(kk, 2 * cfg["layers"])
    kv_flat = []
    kshape = (bs, cfg["kv_heads"], past_len, cfg["head_dim"])
    for li in range(cfg["layers"]):
        kv_flat.append(jax.random.normal(kv_keys[2 * li], kshape,
                                         jnp.float32).astype(jnp.bfloat16))
        kv_flat.append(jax.random.normal(kv_keys[2 * li + 1], kshape,
                                         jnp.float32).astype(jnp.bfloat16))

    outs = base_model_wrapper_forward(params, input_ids, attention_mask,
                                      position_ids, *kv_flat)
    outs = jax.block_until_ready(outs)

    assert outs[0].shape == (bs, 1, cfg["vocab"])
    assert len(outs) == 1 + 2 * cfg["layers"]
    for t in outs[1:]:
        assert t.shape == (bs, cfg["kv_heads"], seqlen, cfg["head_dim"])
    assert all(bool(jnp.all(jnp.isfinite(o.astype(jnp.float32)))) for o in outs)
    print("KERNEL_OK")
</pallas_src>

<mosaic_0001>
module attributes {stable_mosaic.version = 11 : i64} {
  func.func @_rms_matmul_kernel(%arg0: i32, %arg1: memref<2x128xf32, #tpu.memory_space<vmem>>, %arg2: memref<1x128xf32, #tpu.memory_space<vmem>>, %arg3: memref<128x256xbf16, #tpu.memory_space<vmem>>, %arg4: memref<2x256xf32, #tpu.memory_space<vmem>>) attributes {dimension_semantics = [#tpu.dimension_semantics<parallel>], iteration_bounds = array<i64: 1>, scalar_prefetch = 0 : i64, scratch_operands = 0 : i64, tpu.core_type = #tpu.core_type<tc>, window_params = [{pipeline_mode = #tpu.pipeline_mode<synchronous>, transform_indices = @transform_0, window_bounds = array<i64: 2, 128>}, {pipeline_mode = #tpu.pipeline_mode<synchronous>, transform_indices = @transform_1, window_bounds = array<i64: 1, 128>}, {transform_indices = @transform_2, window_bounds = array<i64: 128, 256>}, {transform_indices = @transform_3, window_bounds = array<i64: 2, 256>}]} {
    %c0 = arith.constant 0 : index
    %c0_0 = arith.constant 0 : index
    %0 = vector.load %arg1[%c0, %c0_0] : memref<2x128xf32, #tpu.memory_space<vmem>>, vector<2x128xf32>
    %1 = arith.mulf %0, %0 : vector<2x128xf32>
    %cst = arith.constant dense<0.000000e+00> : vector<2xf32>
    %2 = vector.multi_reduction <add>, %1, %cst [1] : vector<2x128xf32> to vector<2xf32>
    %3 = vector.shape_cast %2 : vector<2xf32> to vector<2x1xf32>
    %cst_1 = arith.constant 1.280000e+02 : f32
    %4 = vector.broadcast %cst_1 : f32 to vector<2x1xf32>
    %5 = arith.divf %3, %4 : vector<2x1xf32>
    %cst_2 = arith.constant 9.99999997E-7 : f32
    %6 = vector.broadcast %cst_2 : f32 to vector<2x1xf32>
    %7 = arith.addf %5, %6 : vector<2x1xf32>
    %8 = math.rsqrt %7 : vector<2x1xf32>
    %9 = vector.broadcast %8 : vector<2x1xf32> to vector<2x128xf32>
    %10 = arith.mulf %0, %9 : vector<2x128xf32>
    %c0_3 = arith.constant 0 : index
    %c0_4 = arith.constant 0 : index
    %11 = vector.load %arg2[%c0_3, %c0_4] : memref<1x128xf32, #tpu.memory_space<vmem>>, vector<1x128xf32>
    %12 = vector.broadcast %11 : vector<1x128xf32> to vector<2x128xf32>
    %13 = arith.mulf %10, %12 : vector<2x128xf32>
    %14 = arith.truncf %13 : vector<2x128xf32> to vector<2x128xbf16>
    %c0_5 = arith.constant 0 : index
    %c0_6 = arith.constant 0 : index
    %15 = vector.load %arg3[%c0_5, %c0_6] : memref<128x256xbf16, #tpu.memory_space<vmem>>, vector<128x256xbf16>
    %cst_7 = arith.constant dense<0.000000e+00> : vector<2x256xf32>
    %16 = tpu.matmul %14, %15, %cst_7 {dimension_numbers = #tpu.dot_dimension_numbers<[1], [0], [0], [1], [0, 0, 1, 1], [], []>} : vector<2x128xbf16>, vector<128x256xbf16>, vector<2x256xf32> -> vector<2x256xf32>
    %c0_8 = arith.constant 0 : index
    %c0_9 = arith.constant 0 : index
    %17 = vector.load %arg4[%c0_8, %c0_9] : memref<2x256xf32, #tpu.memory_space<vmem>>, vector<2x256xf32>
    tpu.vector_store %arg4[%c0_8, %c0_9], %16 {strides = array<i32>} : memref<2x256xf32, #tpu.memory_space<vmem>>, vector<2x256xf32>,
    return
  }
  func.func @transform_0(%arg0: i32) -> (i32, i32) {
    %c0_i32 = arith.constant 0 : i32
    %c0_i32_0 = arith.constant 0 : i32
    %c0_i32_1 = arith.constant 0 : i32
    return %c0_i32, %c0_i32_0 : i32, i32
  }
  func.func @transform_1(%arg0: i32) -> (i32, i32) {
    %c0_i32 = arith.constant 0 : i32
    %c0_i32_0 = arith.constant 0 : i32
    %c0_i32_1 = arith.constant 0 : i32
    return %c0_i32, %c0_i32_0 : i32, i32
  }
  func.func @transform_2(%arg0: i32) -> (i32, i32) {
    %c0_i32 = arith.constant 0 : i32
    %c0_i32_0 = arith.constant 0 : i32
    return %c0_i32, %arg0 : i32, i32
  }
  func.func @transform_3(%arg0: i32) -> (i32, i32) {
    %c0_i32 = arith.constant 0 : i32
    %c0_i32_0 = arith.constant 0 : i32
    return %c0_i32, %arg0 : i32, i32
  }
}

</mosaic_0001>

<llo_original>
// kernel: tpu_custom_call.1
$region0: #{tpu_custom_call.1}
  #allocation0 [shape = 'u32[]', space=smem, size = 0x4, offset = 0x4, fixed_abs, tag = 'smem constant byte address 0x4 - core index']
  #allocation1 [shape = 'u32[144,128]{1,0:T(1,128)}', space=vmem, size = 0x12000, scoped, tag = 'internal scratch']
  %s0 = inlined_call_operand.hbm [shape: f32[2,128], index: 0, kind: input, shape index: {}]
  %s1 = inlined_call_operand.vmem [shape: f32[1,128], index: 1, kind: input, shape index: {}]
  %s2 = inlined_call_operand.hbm [shape: bf16[128,256], index: 2, kind: input, shape index: {}]
  %s3 = inlined_call_operand.hbm [shape: f32[2,256], index: 3, kind: output, shape index: {}]
  %s4 = sld [smem:[#allocation0]]
  $region30: #{tpu_custom_call.1} parent=0
    _
  %s6 = ssub.s32 1, %s4
  %s7 = scalar_select 0, %s6, %s4
  $region1: #{tpu_custom_call.1} parent=0
    #allocation2 [shape = 'u8[1024]{0}', space=vmem, size = 0x400, scoped, tag = 'input window, operand 0, single buffered']
    #allocation3 [shape = 's32[1]{0}', space=sflag, size = 0x4, scoped, tag = 'scoped memory for tpu_custom_call.1']
    #allocation4 [shape = 's32[1]{0}', space=sflag, size = 0x4, scoped, tag = 'scoped memory for tpu_custom_call.1']
    #allocation5 [shape = 'u8[65536]{0}', space=vmem, size = 0x10000, scoped, tag = 'input window, operand 2, single buffered']
    #allocation6 [shape = 's32[1]{0}', space=sflag, size = 0x4, scoped, tag = 'scoped memory for tpu_custom_call.1']
    #allocation7 [shape = 'u8[2048]{0}', space=vmem, size = 0x800, scoped, tag = 'output window, operand 0, single buffered']
    %8 = vsyncpa [#allocation3], 0
    %9 = vsyncpa [#allocation6], 0
    %10 = vsyncpa [#allocation4], 0
    // Predicated region
    $region2: #{tpu_custom_call.1} parent=1 // pred_check
      _
    $region3: #{tpu_custom_call.1} parent=1 // pred_check_branch
      %12 = sbr.rel (0) target = $region5
    $region4: #{tpu_custom_call.1} parent=1 // pred_region
      %s14 = ssub.s32 32, 32
      %15 = vsyncadd [#allocation3], %s14
      %s17 = sshll.u32 [#allocation2], 4
      %s18 = int_to_ptr.vmem [resolvable:$true] %s17
      %20 = dma.hbm_to_vmem [thread:$0]  %s0, 32, %s18, [#allocation3]
    $region5: #{tpu_custom_call.1} parent=1 // pred_fallthru
      _
    // Predicated region
    $region6: #{tpu_custom_call.1} parent=1 // pred_check
      _
    $region7: #{tpu_custom_call.1} parent=1 // pred_check_branch
      %22 = sbr.rel (0) target = $region9
    $region8: #{tpu_custom_call.1} parent=1 // pred_region
      _
    $region9: #{tpu_custom_call.1} parent=1 // pred_fallthru
      _
    // Predicated region
    $region10: #{tpu_custom_call.1} parent=1 // pred_check
      _
    $region11: #{tpu_custom_call.1} parent=1 // pred_check_branch
      %24 = sbr.rel (0) target = $region13
    $region12: #{tpu_custom_call.1} parent=1 // pred_region
      %s26 = ssub.s32 2048, 2048
      %27 = vsyncadd [#allocation6], %s26
      %s28 = sshll.u32 [#allocation5], 4
      %s29 = int_to_ptr.vmem [resolvable:$true] %s28
      %34 = dma.hbm_to_vmem [thread:$0]  %s2, 2048, %s29, [#allocation6], 128, 128, 8
    $region13: #{tpu_custom_call.1} parent=1 // pred_fallthru
      _
    // Predicated region
    $region14: #{tpu_custom_call.1} parent=1 // pred_check
      _
    $region15: #{tpu_custom_call.1} parent=1 // pred_check_branch
      %36 = sbr.rel (0) target = $region17
    $region16: #{tpu_custom_call.1} parent=1 // pred_region
      %37 = dma.done [#allocation3], 32
    $region17: #{tpu_custom_call.1} parent=1 // pred_fallthru
      _
    // Predicated region
    $region18: #{tpu_custom_call.1} parent=1 // pred_check
      _
    $region19: #{tpu_custom_call.1} parent=1 // pred_check_branch
      %39 = sbr.rel (0) target = $region21
    $region20: #{tpu_custom_call.1} parent=1 // pred_region
      %40 = dma.done [#allocation6], 2048
    $region21: #{tpu_custom_call.1} parent=1 // pred_fallthru
      _
    %v42 = vld [vmem:[#allocation2] sm:$0x3]
    %v43 = vmul.f32 %v42, %v42
    %vm44 = vcmask 1041408
    %v45 = vsel %vm44, %v43, 0.0
    %46 = vadd.xlane.f32.xlu0 %v45
    %v47 = vpop.xlane.xlu0 %46
    %v48 = vrcp.pop 128.0
    %v49 = vmul.f32 %v47, %v48
    %v50 = vadd.f32 %v49, 1e-06
    %v51 = vrsqrt.pop %v50
    %v52 = vmul.f32 %v42, %v51
    %v53 = vld [vmem:[%s1] sm:$0x1]
    %v55 = vlaneseq
    %v56 = vshrl.u32 %v55, 7
    %v57 = vsub.s32 0, %v56
    %v58 = vrot.slane %v53, %v57
    %v60 = vmul.f32 %v52, %v58
    %v61 = vpack.c.bf16 %v60, %v60
    %v62 = vld [vmem:[#allocation5] sm:$0xff]
    %v63 = vld [vmem:[#allocation5 + $0x8] sm:$0xff]
    %v64 = vld [vmem:[#allocation5 + $0x10] sm:$0xff]
    %v65 = vld [vmem:[#allocation5 + $0x18] sm:$0xff]
    %v66 = vld [vmem:[#allocation5 + $0x20] sm:$0xff]
    %v67 = vld [vmem:[#allocation5 + $0x28] sm:$0xff]
    %v68 = vld [vmem:[#allocation5 + $0x30] sm:$0xff]
    %v69 = vld [vmem:[#allocation5 + $0x38] sm:$0xff]
    %v70 = vld [vmem:[#allocation5 + $0x40] sm:$0xff]
    %v71 = vld [vmem:[#allocation5 + $0x48] sm:$0xff]
    %v72 = vld [vmem:[#allocation5 + $0x50] sm:$0xff]
    %v73 = vld [vmem:[#allocation5 + $0x58] sm:$0xff]
    %v74 = vld [vmem:[#allocation5 + $0x60] sm:$0xff]
    %v75 = vld [vmem:[#allocation5 + $0x68] sm:$0xff]
    %v76 = vld [vmem:[#allocation5 + $0x70] sm:$0xff]
    %v77 = vld [vmem:[#allocation5 + $0x78] sm:$0xff]
    %v94 = vunpack.c.l.b16 %v62
    %v95 = vunpack.c.h.b16 %v62
    %v96 = vunpack.c.l.b16 %v63
    %v97 = vunpack.c.h.b16 %v63
    %v98 = vunpack.c.l.b16 %v64
    %v99 = vunpack.c.h.b16 %v64
    %v100 = vunpack.c.l.b16 %v65
    %v101 = vunpack.c.h.b16 %v65
    %v102 = vunpack.c.l.b16 %v66
    %v103 = vunpack.c.h.b16 %v66
    %v104 = vunpack.c.l.b16 %v67
    %v105 = vunpack.c.h.b16 %v67
    %v106 = vunpack.c.l.b16 %v68
    %v107 = vunpack.c.h.b16 %v68
    %v108 = vunpack.c.l.b16 %v69
    %v109 = vunpack.c.h.b16 %v69
    %v110 = vunpack.c.l.b16 %v70
    %v111 = vunpack.c.h.b16 %v70
    %v112 = vunpack.c.l.b16 %v71
    %v113 = vunpack.c.h.b16 %v71
    %v114 = vunpack.c.l.b16 %v72
    %v115 = vunpack.c.h.b16 %v72
    %v116 = vunpack.c.l.b16 %v73
    %v117 = vunpack.c.h.b16 %v73
    %v118 = vunpack.c.l.b16 %v74
    %v119 = vunpack.c.h.b16 %v74
    %v120 = vunpack.c.l.b16 %v75
    %v121 = vunpack.c.h.b16 %v75
    %v122 = vunpack.c.l.b16 %v76
    %v123 = vunpack.c.h.b16 %v76
    %v124 = vunpack.c.l.b16 %v77
    %v125 = vunpack.c.h.b16 %v77
    %v126 = vpack.c.b16 %v96, %v94
    %v127 = vpack.c.b16 %v97, %v95
    %v128 = vpack.c.b16 %v100, %v98
    %v129 = vpack.c.b16 %v101, %v99
    %v130 = vpack.c.b16 %v104, %v102
    %v131 = vpack.c.b16 %v105, %v103
    %v132 = vpack.c.b16 %v108, %v106
    %v133 = vpack.c.b16 %v109, %v107
    %v134 = vpack.c.b16 %v112, %v110
    %v135 = vpack.c.b16 %v113, %v111
    %v136 = vpack.c.b16 %v116, %v114
    %v137 = vpack.c.b16 %v117, %v115
    %v138 = vpack.c.b16 %v120, %v118
    %v139 = vpack.c.b16 %v121, %v119
    %v140 = vpack.c.b16 %v124, %v122
    %v141 = vpack.c.b16 %v125, %v123
    %158 = vmatprep.subr.bf16.mxu0 %v127
    %159 = vmatpush1.bf16.msra.mxu0 %v126
    %160 = vmatprep.subr.bf16.mxu0 %v129
    %161 = vmatpush1.bf16.msra.mxu0 %v128
    %162 = vmatprep.subr.bf16.mxu0 %v131
    %163 = vmatpush1.bf16.msra.mxu0 %v130
    %164 = vmatprep.subr.bf16.mxu0 %v133
    %165 = vmatpush1.bf16.msra.mxu0 %v132
    %166 = vmatprep.subr.bf16.mxu0 %v135
    %167 = vmatpush1.bf16.msra.mxu0 %v134
    %168 = vmatprep.subr.bf16.mxu0 %v137
    %169 = vmatpush1.bf16.msra.mxu0 %v136
    %170 = vmatprep.subr.bf16.mxu0 %v139
    %171 = vmatpush1.bf16.msra.mxu0 %v138
    %172 = vmatprep.subr.bf16.mxu0 %v141
    %173 = vmatpush1.bf16.msra.mxu0 %v140
    %174 = vmatprep.subr.bf16.mxu0 0
    %175 = vmatpush1.bf16.msra.mxu0 0
    %176 = vmatprep.subr.bf16.mxu0 0
    %177 = vmatpush1.bf16.msra.mxu0 0
    %178 = vmatprep.subr.bf16.mxu0 0
    %179 = vmatpush1.bf16.msra.mxu0 0
    %180 = vmatprep.subr.bf16.mxu0 0
    %181 = vmatpush1.bf16.msra.mxu0 0
    %182 = vmatprep.subr.bf16.mxu0 0
    %183 = vmatpush1.bf16.msra.mxu0 0
    %184 = vmatprep.subr.bf16.mxu0 0
    %185 = vmatpush1.bf16.msra.mxu0 0
    %186 = vmatprep.subr.bf16.mxu0 0
    %187 = vmatpush1.bf16.msra.mxu0 0
    %188 = vmatprep.subr.bf16.mxu0 0
    %189 = vmatpush1.bf16.msra.mxu0 0
    %190 = vmatprep.mubr.bf16.mxu0 0
    %191 = vmatmul.mubr.bf16.gmra.mrb[0].mxu0 %v61
    %v192 = vpop.f32.mrb[0].mxu0
    %v193 = vadd.f32 0.0, %v192
    %v194 = vpop.f32.mrb[0].mxu0
    %v195 = vadd.f32 0.0, %v194
    %v196 = vpop.f32.mrb[0].mxu0
    %v197 = vpop.f32.mrb[0].mxu0
    %198 = vdwg.mxu0
    %v201 = vcombine.low %v193, %v195
    %v203 = vunpack.c.l.s4 1983009808
    %v204 = vunpack.c.0.s8 %v203
    %v205 = vlaneseq
    %v206 = vshrl.u32 %v205, 7
    %v207 = vsub.s32 %v204, %v206
    %v208 = vrot.slane %v201, %v207
    %210 = vst [vmem:[#allocation7] sm:$0xf] %v208
    // Predicated region
    $region22: #{tpu_custom_call.1} parent=1 // pred_check
      _
    $region23: #{tpu_custom_call.1} parent=1 // pred_check_branch
      %212 = sbr.rel (0) target = $region25
    $region24: #{tpu_custom_call.1} parent=1 // pred_region
      %s214 = ssub.s32 64, 64
      %215 = vsyncadd [#allocation4], %s214
      %s217 = sshll.u32 [#allocation7], 4
      %s218 = int_to_ptr.vmem [resolvable:$true] %s217
      %220 = dma.vmem_to_hbm [thread:$0]  %s218, 64, %s3, [#allocation4]
    $region25: #{tpu_custom_call.1} parent=1 // pred_fallthru
      _
    // Predicated region
    $region26: #{tpu_custom_call.1} parent=1 // pred_check
      _
    $region27: #{tpu_custom_call.1} parent=1 // pred_check_branch
      %222 = sbr.rel (0) target = $region29
    $region28: #{tpu_custom_call.1} parent=1 // pred_region
      %223 = dma.done [#allocation4], 64
    $region29: #{tpu_custom_call.1} parent=1 // pred_fallthru
      _
    %224 = vsyncpa [#allocation3], 1
    %225 = vsyncpa [#allocation6], 1
    %226 = vsyncpa [#allocation4], 1

</llo_original>
